<compile_context>
chip_gen: v7x
topology: tpu7x:2x2x1
jax: 0.10.0
libtpu: 0.0.40
codegen_flags: <defaults>
</compile_context>

<pallas_src>
import functools
import math

import numpy as np
import jax
import jax.numpy as jnp
from jax import lax
from jax.experimental import pallas as pl
from jax.experimental.pallas import tpu as pltpu


# --------------------------------------------------------------------------
# PE table (replicates the PyTorch `pe` buffer of shape (max_len, 1, d_model))
# --------------------------------------------------------------------------
def make_positional_encoding_table(max_len, d_model, dtype=jnp.float32):
    position = jnp.arange(max_len, dtype=jnp.float32)[:, None]
    div_term = jnp.exp(
        jnp.arange(0, d_model, 2, dtype=jnp.float32) * (-math.log(10000.0) / d_model)
    )
    angles = position * div_term                       # (max_len, d_model//2)
    pe = jnp.zeros((max_len, d_model), dtype=jnp.float32)
    pe = pe.at[:, 0::2].set(jnp.sin(angles))
    pe = pe.at[:, 1::2].set(jnp.cos(angles))
    return pe[:, None, :].astype(dtype)                # (max_len, 1, d_model)


# --------------------------------------------------------------------------
# Kernels
# --------------------------------------------------------------------------
def _pe_add_kernel(x_ref, pe_ref, o_ref, *, batch):
    # x_ref/o_ref: (ts, batch*d_model)   pe_ref: (ts, d_model), same dtype as x
    pe = pe_ref[...]
    if batch > 1:
        pe = jnp.tile(pe, (1, batch))                  # repeat across batch lanes
    o_ref[...] = x_ref[...] + pe


def _uniform_from_flat_index(flat_idx_i32, seed_u32):
    """Counter-based hash (lowbias32-style) -> uniform float32 in [0, 1)."""
    h = flat_idx_i32.astype(jnp.uint32)
    h = h * jnp.uint32(0x9E3779B1) + seed_u32 * jnp.uint32(0x85EBCA77)
    h = h ^ (h >> 16)
    h = h * jnp.uint32(0x7FEB352D)
    h = h ^ (h >> 15)
    h = h * jnp.uint32(0x846CA68B)
    h = h ^ (h >> 16)
    # Low 24 bits via int32 (exact sitofp) -> [0, 1). No uint threshold overflow.
    return (h & jnp.uint32(0x00FFFFFF)).astype(jnp.int32).astype(jnp.float32) * \
        jnp.float32(1.0 / (1 << 24))


def _pe_add_dropout_kernel(seed_ref, x_ref, pe_ref, o_ref, *, batch, dropout_p):
    # Training forward: (x + pe) with inverted dropout.  The keep mask depends
    # only on (seed, absolute element index) so it is independent of tiling.
    pe = pe_ref[...]
    if batch > 1:
        pe = jnp.tile(pe, (1, batch))
    y = x_ref[...] + pe

    ts, width = y.shape
    row0 = pl.program_id(0) * ts                       # absolute sequence offset
    rows = lax.broadcasted_iota(jnp.int32, y.shape, 0) + row0
    cols = lax.broadcasted_iota(jnp.int32, y.shape, 1)
    flat = rows * width + cols                         # global flat element index
    u = _uniform_from_flat_index(flat, seed_ref[0].astype(jnp.uint32))

    keep = u >= jnp.float32(dropout_p)                 # P(drop) = dropout_p
    scale = jnp.asarray(1.0 / (1.0 - dropout_p), dtype=y.dtype)
    o_ref[...] = jnp.where(keep, y * scale, jnp.zeros_like(y))


# --------------------------------------------------------------------------
# Tiling helpers (padding- and generation-aware)
# --------------------------------------------------------------------------
def _round_up(v, m):
    return ((v + m - 1) // m) * m


def _vmem_budget():
    # v5e/v6e: 128 MiB VMEM per TensorCore -> 64 MiB limit / 48 MiB tile budget.
    # v7x:      64 MiB                     -> 32 MiB limit / 24 MiB tile budget.
    try:
        cap = int(getattr(pltpu.get_tpu_info(), "vmem_capacity_bytes", 0))
    except Exception:
        cap = 0
    if cap <= 0:
        cap = 64 * 1024 * 1024                         # conservative (v7x-sized)
    vmem_limit = min(cap // 2, 64 * 1024 * 1024)
    return vmem_limit, (vmem_limit * 3) // 4


def _padded_row_bytes(width, x_itemsize, d_model, pe_itemsize):
    # VMEM bytes per sequence row with (8,128)-tile lane padding, counting the
    # double-buffered pipeline: 2 buffers each for the x block, out block, pe block.
    x_row = _round_up(width, 128) * x_itemsize
    pe_row = _round_up(d_model, 128) * pe_itemsize
    return 2 * (2 * x_row + pe_row)


def _choose_seq_tile(seq_len, per_row_bytes, budget_bytes, *, min_blocks=8, min_rows=32):
    ts = max(1, budget_bytes // max(per_row_bytes, 1))
    # Never collapse a long sequence into one giant block: keep >= min_blocks
    # grid steps so input DMA / compute / output DMA overlap and v7x megacore
    # can shard the grid, while keeping blocks >= min_rows so the ~0.35 us
    # per-step overhead stays negligible.
    cap = max(min_rows, -(-seq_len // min_blocks))
    ts = min(ts, cap)
    if ts >= seq_len:
        return seq_len                                 # tiny input: one full block
    return max(8, (ts // 8) * 8)                       # keep (8,128) tiling happy


# --------------------------------------------------------------------------
# Wrapper
# --------------------------------------------------------------------------
def positional_encoding_forward(x, pe_table, *, dropout_p=0.1, training=False,
                                rng_seed=0):
    """x: (S, N, D).  pe_table: (max_len, 1, D).  Returns (S, N, D)."""
    seq_len, batch, d_model = x.shape
    assert pe_table.shape[0] >= seq_len and pe_table.shape[-1] == d_model

    if training and dropout_p >= 1.0:                  # torch: everything dropped
        return jnp.zeros_like(x)

    # PE as dense 2D (S, D), pre-cast to the activation dtype (one-time cast).
    pe = pe_table[:seq_len].reshape(seq_len, d_model).astype(x.dtype)
    # Lane-dense 2D view of x: (S, N, D) -> (S, N*D) (contiguous, free).
    width = batch * d_model
    x2 = x.reshape(seq_len, width)

    vmem_limit, tile_budget = _vmem_budget()
    per_row = _padded_row_bytes(width, x.dtype.itemsize, d_model, pe.dtype.itemsize)
    ts = _choose_seq_tile(seq_len, per_row, tile_budget)
    grid = (pl.cdiv(seq_len, ts),)

    x_spec = pl.BlockSpec((ts, width), lambda i: (i, 0))
    pe_spec = pl.BlockSpec((ts, d_model), lambda i: (i, 0))
    out_spec = pl.BlockSpec((ts, width), lambda i: (i, 0))
    out_shape = jax.ShapeDtypeStruct((seq_len, width), x.dtype)
    compiler_params = pltpu.CompilerParams(
        dimension_semantics=("parallel",),             # megacore-shardable (v7x)
        vmem_limit_bytes=vmem_limit,
    )

    if training and dropout_p > 0.0:
        # TODO(synk): dropout matches torch.nn.Dropout statistically but cannot
        # bit-match torch's RNG stream.
        kernel = functools.partial(_pe_add_dropout_kernel, batch=batch,
                                   dropout_p=float(dropout_p))
        seed = jnp.asarray([rng_seed], dtype=jnp.int32)
        out2 = pl.pallas_call(
            kernel,
            out_shape=out_shape,
            grid=grid,
            in_specs=[
                pl.BlockSpec(memory_space=pltpu.MemorySpace.SMEM),  # seed scalar
                x_spec,
                pe_spec,
            ],
            out_specs=out_spec,
            compiler_params=compiler_params,
        )(seed, x2, pe)
    else:
        kernel = functools.partial(_pe_add_kernel, batch=batch)
        out2 = pl.pallas_call(
            kernel,
            out_shape=out_shape,
            grid=grid,
            in_specs=[x_spec, pe_spec],
            out_specs=out_spec,
            compiler_params=compiler_params,
        )(x2, pe)

    return out2.reshape(seq_len, batch, d_model)


# --------------------------------------------------------------------------
if __name__ == "__main__":
    d_model = 32
    max_len = 5000
    dropout_p = 0.1
    seq_len, batch = 8, 2

    pe_table = make_positional_encoding_table(max_len, d_model)

    key = jax.random.PRNGKey(0)
    x = jax.random.normal(key, (seq_len, batch, d_model), dtype=jnp.float32)

    # Eval-mode forward (dropout = identity): must match x + pe exactly.
    out_eval = positional_encoding_forward(
        x, pe_table, dropout_p=dropout_p, training=False)
    out_eval = jax.block_until_ready(out_eval)
    ref = x + pe_table[:seq_len]                       # broadcast over batch
    assert out_eval.shape == (seq_len, batch, d_model)
    assert jnp.allclose(out_eval, ref, atol=1e-6, rtol=1e-6)

    # Training-mode forward (in-kernel dropout): structural / statistical checks.
    out_train = positional_encoding_forward(
        x, pe_table, dropout_p=dropout_p, training=True, rng_seed=1234)
    out_train = jax.block_until_ready(out_train)
    assert out_train.shape == (seq_len, batch, d_model)
    out_np = np.asarray(out_train)
    ref_np = np.asarray(ref)
    zeros = int((out_np == 0.0).sum())
    assert 0 < zeros < out_np.size // 2                # ~10% expected dropped
    kept = out_np != 0.0
    assert np.allclose(out_np[kept], ref_np[kept] / (1.0 - dropout_p),
                       atol=1e-5, rtol=1e-5)

    print("KERNEL_OK")
</pallas_src>

<mosaic_0001>
module attributes {stable_mosaic.version = 11 : i64} {
  func.func @_pe_add_kernel(%arg0: i32, %arg1: memref<8x64xf32, #tpu.memory_space<vmem>>, %arg2: memref<8x32xf32, #tpu.memory_space<vmem>>, %arg3: memref<8x64xf32, #tpu.memory_space<vmem>>) attributes {dimension_semantics = [#tpu.dimension_semantics<parallel>], iteration_bounds = array<i64: 1>, scalar_prefetch = 0 : i64, scratch_operands = 0 : i64, tpu.core_type = #tpu.core_type<tc>, window_params = [{transform_indices = @transform_0, window_bounds = array<i64: 8, 64>}, {transform_indices = @transform_1, window_bounds = array<i64: 8, 32>}, {transform_indices = @transform_2, window_bounds = array<i64: 8, 64>}]} {
    %c0 = arith.constant 0 : index
    %c0_0 = arith.constant 0 : index
    %0 = vector.load %arg2[%c0, %c0_0] : memref<8x32xf32, #tpu.memory_space<vmem>>, vector<8x32xf32>
    %1 = tpu.concatenate %0, %0 in 1 : vector<8x32xf32>, vector<8x32xf32> -> vector<8x64xf32>
    %c0_1 = arith.constant 0 : index
    %c0_2 = arith.constant 0 : index
    %2 = vector.load %arg1[%c0_1, %c0_2] : memref<8x64xf32, #tpu.memory_space<vmem>>, vector<8x64xf32>
    %3 = arith.addf %2, %1 : vector<8x64xf32>
    %c0_3 = arith.constant 0 : index
    %c0_4 = arith.constant 0 : index
    %4 = vector.load %arg3[%c0_3, %c0_4] : memref<8x64xf32, #tpu.memory_space<vmem>>, vector<8x64xf32>
    tpu.vector_store %arg3[%c0_3, %c0_4], %3 {strides = array<i32>} : memref<8x64xf32, #tpu.memory_space<vmem>>, vector<8x64xf32>,
    return
  }
  func.func @transform_0(%arg0: i32) -> (i32, i32) {
    %c0_i32 = arith.constant 0 : i32
    %c0_i32_0 = arith.constant 0 : i32
    return %arg0, %c0_i32 : i32, i32
  }
  func.func @transform_1(%arg0: i32) -> (i32, i32) {
    %c0_i32 = arith.constant 0 : i32
    %c0_i32_0 = arith.constant 0 : i32
    return %arg0, %c0_i32 : i32, i32
  }
  func.func @transform_2(%arg0: i32) -> (i32, i32) {
    %c0_i32 = arith.constant 0 : i32
    %c0_i32_0 = arith.constant 0 : i32
    return %arg0, %c0_i32 : i32, i32
  }
}

</mosaic_0001>

<llo_original>
// kernel: tpu_custom_call.1
$region0: #{tpu_custom_call.1}
  #allocation0 [shape = 'u32[]', space=smem, size = 0x4, offset = 0x4, fixed_abs, tag = 'smem constant byte address 0x4 - core index']
  #allocation1 [shape = 'u32[144,128]{1,0:T(1,128)}', space=vmem, size = 0x12000, scoped, tag = 'internal scratch']
  %s0 = inlined_call_operand.hbm [shape: f32[8,64], index: 0, kind: input, shape index: {}]
  %s1 = inlined_call_operand.hbm [shape: f32[8,32], index: 1, kind: input, shape index: {}]
  %s2 = inlined_call_operand.hbm [shape: f32[8,64], index: 2, kind: output, shape index: {}]
  %s3 = sld [smem:[#allocation0]]
  $region26: #{tpu_custom_call.1} parent=0
    _
  %s5 = ssub.s32 1, %s3
  %s6 = scalar_select 0, %s5, %s3
  $region1: #{tpu_custom_call.1} parent=0
    #allocation2 [shape = 'u8[4096]{0}', space=vmem, size = 0x1000, scoped, tag = 'input window, operand 0, single buffered']
    #allocation3 [shape = 's32[1]{0}', space=sflag, size = 0x4, scoped, tag = 'scoped memory for tpu_custom_call.1']
    #allocation4 [shape = 's32[1]{0}', space=sflag, size = 0x4, scoped, tag = 'scoped memory for tpu_custom_call.1']
    #allocation5 [shape = 'u8[4096]{0}', space=vmem, size = 0x1000, scoped, tag = 'input window, operand 1, single buffered']
    #allocation6 [shape = 's32[1]{0}', space=sflag, size = 0x4, scoped, tag = 'scoped memory for tpu_custom_call.1']
    #allocation7 [shape = 'u8[4096]{0}', space=vmem, size = 0x1000, scoped, tag = 'output window, operand 0, single buffered']
    %7 = vsyncpa [#allocation3], 0
    %8 = vsyncpa [#allocation6], 0
    %9 = vsyncpa [#allocation4], 0
    // Predicated region
    $region2: #{tpu_custom_call.1} parent=1 // pred_check
      _
    $region3: #{tpu_custom_call.1} parent=1 // pred_check_branch
      %11 = sbr.rel (0) target = $region5
    $region4: #{tpu_custom_call.1} parent=1 // pred_region
      %s13 = ssub.s32 128, 128
      %14 = vsyncadd [#allocation3], %s13
      %s16 = sshll.u32 [#allocation2], 4
      %s17 = int_to_ptr.vmem [resolvable:$true] %s16
      %19 = dma.hbm_to_vmem [thread:$0]  %s0, 128, %s17, [#allocation3]
    $region5: #{tpu_custom_call.1} parent=1 // pred_fallthru
      _
    // Predicated region
    $region6: #{tpu_custom_call.1} parent=1 // pred_check
      _
    $region7: #{tpu_custom_call.1} parent=1 // pred_check_branch
      %21 = sbr.rel (0) target = $region9
    $region8: #{tpu_custom_call.1} parent=1 // pred_region
      %s23 = ssub.s32 128, 128
      %24 = vsyncadd [#allocation6], %s23
      %s26 = sshll.u32 [#allocation5], 4
      %s27 = int_to_ptr.vmem [resolvable:$true] %s26
      %29 = dma.hbm_to_vmem [thread:$0]  %s1, 128, %s27, [#allocation6]
    $region9: #{tpu_custom_call.1} parent=1 // pred_fallthru
      _
    // Predicated region
    $region10: #{tpu_custom_call.1} parent=1 // pred_check
      _
    $region11: #{tpu_custom_call.1} parent=1 // pred_check_branch
      %31 = sbr.rel (0) target = $region13
    $region12: #{tpu_custom_call.1} parent=1 // pred_region
      %32 = dma.done [#allocation3], 128
    $region13: #{tpu_custom_call.1} parent=1 // pred_fallthru
      _
    // Predicated region
    $region14: #{tpu_custom_call.1} parent=1 // pred_check
      _
    $region15: #{tpu_custom_call.1} parent=1 // pred_check_branch
      %34 = sbr.rel (0) target = $region17
    $region16: #{tpu_custom_call.1} parent=1 // pred_region
      %35 = dma.done [#allocation6], 128
    $region17: #{tpu_custom_call.1} parent=1 // pred_fallthru
      _
    %v36 = vld [vmem:[#allocation5] sm:$0xff]
    %38 = vrot.lane.b32.xlu0 %v36, 32
    %v39 = vpop.permute.xlu0 %38
    %vm41 = vcmask 261120
    %v42 = vsel %vm41, %v36, %v39
    %v43 = vld [vmem:[#allocation2] sm:$0xff]
    %v44 = vadd.f32 %v43, %v42
    %vm45 = vcmask 523264
    %46 = vst.msk [vmem:[#allocation7] sm:$0xff] %vm45, %v44
    // Predicated region
    $region18: #{tpu_custom_call.1} parent=1 // pred_check
      _
    $region19: #{tpu_custom_call.1} parent=1 // pred_check_branch
      %48 = sbr.rel (0) target = $region21
    $region20: #{tpu_custom_call.1} parent=1 // pred_region
      %s50 = ssub.s32 128, 128
      %51 = vsyncadd [#allocation4], %s50
      %s53 = sshll.u32 [#allocation7], 4
      %s54 = int_to_ptr.vmem [resolvable:$true] %s53
      %56 = dma.vmem_to_hbm [thread:$0]  %s54, 128, %s2, [#allocation4]
    $region21: #{tpu_custom_call.1} parent=1 // pred_fallthru
      _
    // Predicated region
    $region22: #{tpu_custom_call.1} parent=1 // pred_check
      _
    $region23: #{tpu_custom_call.1} parent=1 // pred_check_branch
      %58 = sbr.rel (0) target = $region25
    $region24: #{tpu_custom_call.1} parent=1 // pred_region
      %59 = dma.done [#allocation4], 128
    $region25: #{tpu_custom_call.1} parent=1 // pred_fallthru
      _
    %60 = vsyncpa [#allocation3], 1
    %61 = vsyncpa [#allocation6], 1
    %62 = vsyncpa [#allocation4], 1

</llo_original>
